<compile_context>
chip_gen: v6e
topology: v6e:2x2x1
jax: 0.10.0
libtpu: 0.0.40
codegen_flags: <defaults>
</compile_context>

<pallas_src>
import jax
import jax.numpy as jnp
from jax.experimental import pallas as pl
from jax.experimental.pallas import tpu as pltpu

IGNORE_INDEX = -100


# ----------------- fused LM-head matmul + cross-entropy kernel -------------- #
def _lm_head_ce_kernel(h_ref, w_ref, b_ref, lab_ref, loss_ref,
                       m_sc, l_sc, g_sc):
    """One (row-tile, vocab-tile) step: logits tile + online softmax CE."""
    j = pl.program_id(1)                       # vocab (reduction) axis, last
    tv = w_ref.shape[-1]

    @pl.when(j == 0)
    def _():
        m_sc[...] = jnp.full_like(m_sc, -jnp.inf)
        l_sc[...] = jnp.zeros_like(l_sc)
        g_sc[...] = jnp.zeros_like(g_sc)

    # (tm, D) bf16 @ (D, tv) bf16 -> (tm, tv) f32 on the MXU, plus bias.
    logits = jnp.dot(h_ref[...], w_ref[...],
                     preferred_element_type=jnp.float32) + b_ref[...]

    # Gold-class logit via one-hot match inside this vocab tile.
    col = j * tv + jax.lax.broadcasted_iota(jnp.int32, logits.shape, 1)
    hit = col == lab_ref[...]                  # (tm, tv) vs (tm, 1)
    g_sc[...] += jnp.sum(jnp.where(hit, logits, 0.0), axis=-1, keepdims=True)

    # Online log-sum-exp accumulation across vocab tiles.
    m_prev = m_sc[...]
    m_new = jnp.maximum(m_prev, jnp.max(logits, axis=-1, keepdims=True))
    l_sc[...] = (l_sc[...] * jnp.exp(m_prev - m_new)
                 + jnp.sum(jnp.exp(logits - m_new), axis=-1, keepdims=True))
    m_sc[...] = m_new

    @pl.when(j == pl.num_programs(1) - 1)
    def _():
        # per-row CE: logsumexp(logits) - logit[label]
        loss_ref[...] = m_sc[...] + jnp.log(l_sc[...]) - g_sc[...]


def fused_lm_head_cross_entropy(hidden, w_t_bf16, bias, labels, *, tv=256):
    """hidden: (N, D), w_t_bf16: (D, V) bf16, bias: (1, V) f32,
    labels: (N,) int32 (-100 = ignore). Returns per-row CE loss (N, 1) f32."""
    n, d = hidden.shape
    d2, v = w_t_bf16.shape
    assert d == d2 and v % tv == 0, (hidden.shape, w_t_bf16.shape, tv)

    # Row tile: all rows (padded to a multiple of 8) if small, else 128.
    tm = 128 if n >= 128 else ((n + 7) // 8) * 8
    n_pad = ((n + tm - 1) // tm) * tm
    if n_pad != n:
        hidden = jnp.pad(hidden, ((0, n_pad - n), (0, 0)))
        labels = jnp.pad(labels, (0, n_pad - n), constant_values=IGNORE_INDEX)

    h_bf = hidden.astype(jnp.bfloat16)
    lab2d = labels.reshape(n_pad, 1).astype(jnp.int32)

    loss_rows = pl.pallas_call(
        _lm_head_ce_kernel,
        out_shape=jax.ShapeDtypeStruct((n_pad, 1), jnp.float32),
        grid=(n_pad // tm, v // tv),
        in_specs=[
            pl.BlockSpec((tm, d), lambda i, j: (i, 0)),
            pl.BlockSpec((d, tv), lambda i, j: (0, j)),
            pl.BlockSpec((1, tv), lambda i, j: (0, j)),
            pl.BlockSpec((tm, 1), lambda i, j: (i, 0)),
        ],
        out_specs=pl.BlockSpec((tm, 1), lambda i, j: (i, 0)),
        scratch_shapes=[pltpu.VMEM((tm, 1), jnp.float32)] * 3,
        compiler_params=pltpu.CompilerParams(
            dimension_semantics=("parallel", "arbitrary")),
    )(h_bf, w_t_bf16, bias, lab2d)
    return loss_rows[:n]


# --------------------------------- Module ----------------------------------- #
class MultiModalBartDecoderMLMPallas:
    def __init__(self, key, vocab_size, d_model, pad_token_id=1):
        self.vocab_size = vocab_size
        self.d_model = d_model
        self.pad_token_id = pad_token_id
        self.embed_scale = float(d_model) ** 0.5

        # decoder.embed_tokens.weight (V, D); also the weight-tied LM head.
        self.embed_tokens = (jax.random.normal(key, (vocab_size, d_model),
                                               jnp.float32) * 0.02)
        # register_buffer('final_logits_bias', zeros((1, V)))
        self.final_logits_bias = jnp.zeros((1, vocab_size), jnp.float32)
        # Pre-transposed bf16 copy of the tied LM-head weight: lane-dense
        # (D, tv) tiles, half the HBM weight traffic (frozen/inference path).
        self.lm_head_w_t = self.embed_tokens.T.astype(jnp.bfloat16)

    # ---- _prepare_bart_decoder_inputs (plain-JAX glue) ----
    def _shift_tokens_right(self, input_ids):
        pad = self.pad_token_id
        idx_eos = jnp.sum((input_ids != pad).astype(jnp.int32), axis=1) - 1
        first = jnp.take_along_axis(input_ids, idx_eos[:, None], axis=1)
        return jnp.concatenate([first, input_ids[:, :-1]], axis=1)

    def _prepare_bart_decoder_inputs(self, input_ids, decoder_input_ids,
                                     decoder_attention_mask, dtype):
        if decoder_input_ids is None:
            decoder_input_ids = self._shift_tokens_right(input_ids)
        s = decoder_input_ids.shape[1]
        if decoder_attention_mask is None:
            decoder_padding_mask = decoder_input_ids == self.pad_token_id
        else:
            decoder_padding_mask = decoder_attention_mask == 0   # invert_mask
        causal_mask = jnp.triu(
            jnp.full((s, s), jnp.finfo(dtype).min, dtype), k=1)
        return decoder_input_ids, decoder_padding_mask, causal_mask

    # ---- external BART decoder stand-in (plain-JAX glue) ----
    def _decoder_standin(self, decoder_input_ids, encoder_outputs,
                         attention_mask, decoder_padding_mask, causal_mask):
        # TODO(synk): real BART decoder stack is external to this module;
        # deterministic stand-in: embedding + causal prefix mean + enc pooling.
        del causal_mask  # causality handled by the cumulative prefix mean
        emb = self.embed_tokens[decoder_input_ids] * self.embed_scale  # (B,S,D)
        keep = jnp.logical_not(decoder_padding_mask)[..., None].astype(emb.dtype)
        emb = emb * keep
        prefix = jnp.cumsum(emb, axis=1) / jnp.maximum(
            jnp.cumsum(keep, axis=1), 1.0)
        am = attention_mask[..., None].astype(emb.dtype)
        enc = jnp.sum(encoder_outputs * am, axis=1, keepdims=True) / jnp.maximum(
            jnp.sum(am, axis=1, keepdims=True), 1.0)
        return emb + 0.5 * prefix + 0.5 * enc                          # (B,S,D)

    def __call__(self, labels, input_ids, encoder_outputs, attention_mask,
                 decoder_input_ids, decoder_attention_mask):
        (decoder_input_ids, decoder_padding_mask,
         causal_mask) = self._prepare_bart_decoder_inputs(
            input_ids, decoder_input_ids, decoder_attention_mask,
            self.embed_tokens.dtype)

        hidden = self._decoder_standin(decoder_input_ids, encoder_outputs,
                                       attention_mask, decoder_padding_mask,
                                       causal_mask)                    # (B,S,D)

        # lm_logits = F.linear(hidden[:, 1:], embed_tokens.weight, bias) fused
        # with CrossEntropyLoss into one Pallas kernel (logits never hit HBM).
        h = hidden[:, 1:, :].reshape(-1, self.d_model)                 # (N, D)
        lab = labels.reshape(-1).astype(jnp.int32)                     # (N,)
        loss_rows = fused_lm_head_cross_entropy(
            h, self.lm_head_w_t, self.final_logits_bias, lab)          # (N, 1)

        valid = (lab != IGNORE_INDEX).astype(jnp.float32)
        lm_loss = (jnp.sum(loss_rows[:, 0] * valid)
                   / jnp.maximum(jnp.sum(valid), 1.0))
        return lm_loss


# ----------------------------------- main ------------------------------------ #
if __name__ == "__main__":
    key = jax.random.PRNGKey(0)
    k_params, k_in, k_dec, k_lab, k_enc = jax.random.split(key, 5)

    B, S_dec, S_enc = 2, 8, 8
    D, V = 64, 1024

    module = MultiModalBartDecoderMLMPallas(k_params, vocab_size=V, d_model=D)

    input_ids = jax.random.randint(k_in, (B, S_enc), 0, V)
    attention_mask = jnp.ones((B, S_enc), jnp.int32)
    encoder_outputs = jax.random.normal(k_enc, (B, S_enc, D), jnp.float32)
    decoder_input_ids = jax.random.randint(k_dec, (B, S_dec), 0, V)
    decoder_attention_mask = jnp.ones((B, S_dec), jnp.int32)
    labels = jax.random.randint(k_lab, (B, S_dec - 1), 0, V)
    labels = labels.at[0, 0].set(IGNORE_INDEX)   # exercise ignore_index

    lm_loss = module(labels, input_ids, encoder_outputs, attention_mask,
                     decoder_input_ids, decoder_attention_mask)
    jax.block_until_ready(lm_loss)

    # Pure-JAX reference (same bf16 matmul inputs) for a sanity check.
    dec_ids, pad_mask, causal = module._prepare_bart_decoder_inputs(
        input_ids, decoder_input_ids, decoder_attention_mask,
        module.embed_tokens.dtype)
    hidden = module._decoder_standin(dec_ids, encoder_outputs, attention_mask,
                                     pad_mask, causal)
    h_ref = hidden[:, 1:, :].reshape(-1, D).astype(jnp.bfloat16)
    logits = (jnp.dot(h_ref, module.lm_head_w_t,
                      preferred_element_type=jnp.float32)
              + module.final_logits_bias)
    lab = labels.reshape(-1)
    lse = jax.scipy.special.logsumexp(logits, axis=-1)
    gold = jnp.take_along_axis(logits, jnp.where(lab < 0, 0, lab)[:, None],
                               axis=-1)[:, 0]
    valid = (lab != IGNORE_INDEX).astype(jnp.float32)
    ref = jnp.sum((lse - gold) * valid) / jnp.maximum(jnp.sum(valid), 1.0)

    assert bool(jnp.isfinite(lm_loss))
    assert abs(float(lm_loss) - float(ref)) < 2e-2 * max(1.0, abs(float(ref)))
    print("KERNEL_OK")
</pallas_src>

<mosaic_0001>
module attributes {stable_mosaic.version = 11 : i64} {
  func.func @_lm_head_ce_kernel(%arg0: i32, %arg1: i32, %arg2: memref<16x64xbf16, #tpu.memory_space<vmem>>, %arg3: memref<64x256xbf16, #tpu.memory_space<vmem>>, %arg4: memref<1x256xf32, #tpu.memory_space<vmem>>, %arg5: memref<16x1xi32, #tpu.memory_space<vmem>>, %arg6: memref<16x1xf32, #tpu.memory_space<vmem>>, %arg7: memref<16x1xf32, #tpu.memory_space<vmem>>, %arg8: memref<16x1xf32, #tpu.memory_space<vmem>>, %arg9: memref<16x1xf32, #tpu.memory_space<vmem>>) attributes {dimension_semantics = [#tpu.dimension_semantics<parallel>, #tpu.dimension_semantics<arbitrary>], iteration_bounds = array<i64: 1, 4>, scalar_prefetch = 0 : i64, scratch_operands = 3 : i64, tpu.core_type = #tpu.core_type<tc>, window_params = [{transform_indices = @transform_0, window_bounds = array<i64: 16, 64>}, {transform_indices = @transform_1, window_bounds = array<i64: 64, 256>}, {transform_indices = @transform_2, window_bounds = array<i64: 1, 256>}, {transform_indices = @transform_3, window_bounds = array<i64: 16, 1>}, {transform_indices = @transform_4, window_bounds = array<i64: 16, 1>}]} {
    %c0_i32 = arith.constant 0 : i32
    %0 = arith.cmpi eq, %arg1, %c0_i32 : i32
    %1 = arith.extui %0 : i1 to i32
    %c0_i32_0 = arith.constant 0 : i32
    %2 = arith.cmpi ne, %1, %c0_i32_0 : i32
    scf.if %2 {
      %cst_25 = arith.constant 0xFF800000 : f32
      %42 = vector.broadcast %cst_25 : f32 to vector<16x1xf32>
      %c0_26 = arith.constant 0 : index
      %c0_27 = arith.constant 0 : index
      %43 = vector.load %arg7[%c0_26, %c0_27] : memref<16x1xf32, #tpu.memory_space<vmem>>, vector<16x1xf32>
      tpu.vector_store %arg7[%c0_26, %c0_27], %42 {strides = array<i32>} : memref<16x1xf32, #tpu.memory_space<vmem>>, vector<16x1xf32>,
      %cst_28 = arith.constant 0.000000e+00 : f32
      %44 = vector.broadcast %cst_28 : f32 to vector<16x1xf32>
      %c0_29 = arith.constant 0 : index
      %c0_30 = arith.constant 0 : index
      %45 = vector.load %arg8[%c0_29, %c0_30] : memref<16x1xf32, #tpu.memory_space<vmem>>, vector<16x1xf32>
      tpu.vector_store %arg8[%c0_29, %c0_30], %44 {strides = array<i32>} : memref<16x1xf32, #tpu.memory_space<vmem>>, vector<16x1xf32>,
      %cst_31 = arith.constant 0.000000e+00 : f32
      %46 = vector.broadcast %cst_31 : f32 to vector<16x1xf32>
      %c0_32 = arith.constant 0 : index
      %c0_33 = arith.constant 0 : index
      %47 = vector.load %arg9[%c0_32, %c0_33] : memref<16x1xf32, #tpu.memory_space<vmem>>, vector<16x1xf32>
      tpu.vector_store %arg9[%c0_32, %c0_33], %46 {strides = array<i32>} : memref<16x1xf32, #tpu.memory_space<vmem>>, vector<16x1xf32>,
    } else {
    }
    %c0 = arith.constant 0 : index
    %c0_1 = arith.constant 0 : index
    %3 = vector.load %arg2[%c0, %c0_1] : memref<16x64xbf16, #tpu.memory_space<vmem>>, vector<16x64xbf16>
    %c0_2 = arith.constant 0 : index
    %c0_3 = arith.constant 0 : index
    %4 = vector.load %arg3[%c0_2, %c0_3] : memref<64x256xbf16, #tpu.memory_space<vmem>>, vector<64x256xbf16>
    %cst = arith.constant dense<0.000000e+00> : vector<16x256xf32>
    %5 = tpu.matmul %3, %4, %cst {dimension_numbers = #tpu.dot_dimension_numbers<[1], [0], [0], [1], [0, 0, 1, 1], [], []>} : vector<16x64xbf16>, vector<64x256xbf16>, vector<16x256xf32> -> vector<16x256xf32>
    %c0_4 = arith.constant 0 : index
    %c0_5 = arith.constant 0 : index
    %6 = vector.load %arg4[%c0_4, %c0_5] : memref<1x256xf32, #tpu.memory_space<vmem>>, vector<1x256xf32>
    %7 = vector.broadcast %6 : vector<1x256xf32> to vector<16x256xf32>
    %8 = arith.addf %5, %7 : vector<16x256xf32>
    %c256_i32 = arith.constant 256 : i32
    %9 = arith.muli %arg1, %c256_i32 : i32
    %10 = tpu.iota {dimensions = array<i32: 1>} : vector<16x256xi32>
    %11 = vector.broadcast %9 : i32 to vector<16x256xi32>
    %12 = arith.addi %11, %10 : vector<16x256xi32>
    %c0_6 = arith.constant 0 : index
    %c0_7 = arith.constant 0 : index
    %13 = vector.load %arg5[%c0_6, %c0_7] : memref<16x1xi32, #tpu.memory_space<vmem>>, vector<16x1xi32>
    %14 = vector.broadcast %13 : vector<16x1xi32> to vector<16x256xi32>
    %15 = arith.cmpi eq, %12, %14 : vector<16x256xi32>
    %c0_8 = arith.constant 0 : index
    %c0_9 = arith.constant 0 : index
    %16 = vector.load %arg9[%c0_8, %c0_9] : memref<16x1xf32, #tpu.memory_space<vmem>>, vector<16x1xf32>
    %cst_10 = arith.constant 0.000000e+00 : f32
    %17 = vector.broadcast %cst_10 : f32 to vector<16x256xf32>
    %18 = arith.select %15, %8, %17 : vector<16x256xi1>, vector<16x256xf32>
    %cst_11 = arith.constant dense<0.000000e+00> : vector<16xf32>
    %19 = vector.multi_reduction <add>, %18, %cst_11 [1] : vector<16x256xf32> to vector<16xf32>
    %20 = vector.shape_cast %19 : vector<16xf32> to vector<16x1xf32>
    %21 = arith.addf %16, %20 : vector<16x1xf32>
    %c0_12 = arith.constant 0 : index
    %c0_13 = arith.constant 0 : index
    %22 = vector.load %arg9[%c0_12, %c0_13] : memref<16x1xf32, #tpu.memory_space<vmem>>, vector<16x1xf32>
    tpu.vector_store %arg9[%c0_12, %c0_13], %21 {strides = array<i32>} : memref<16x1xf32, #tpu.memory_space<vmem>>, vector<16x1xf32>,
    %c0_14 = arith.constant 0 : index
    %c0_15 = arith.constant 0 : index
    %23 = vector.load %arg7[%c0_14, %c0_15] : memref<16x1xf32, #tpu.memory_space<vmem>>, vector<16x1xf32>
    %cst_16 = arith.constant dense<0xFF800000> : vector<16xf32>
    %24 = vector.multi_reduction <maximumf>, %8, %cst_16 [1] : vector<16x256xf32> to vector<16xf32>
    %25 = vector.shape_cast %24 : vector<16xf32> to vector<16x1xf32>
    %26 = arith.maximumf %23, %25 : vector<16x1xf32>
    %c0_17 = arith.constant 0 : index
    %c0_18 = arith.constant 0 : index
    %27 = vector.load %arg8[%c0_17, %c0_18] : memref<16x1xf32, #tpu.memory_space<vmem>>, vector<16x1xf32>
    %28 = arith.subf %23, %26 : vector<16x1xf32>
    %29 = math.exp %28 : vector<16x1xf32>
    %30 = arith.mulf %27, %29 : vector<16x1xf32>
    %31 = vector.broadcast %26 : vector<16x1xf32> to vector<16x256xf32>
    %32 = arith.subf %8, %31 : vector<16x256xf32>
    %33 = math.exp %32 : vector<16x256xf32>
    %cst_19 = arith.constant dense<0.000000e+00> : vector<16xf32>
    %34 = vector.multi_reduction <add>, %33, %cst_19 [1] : vector<16x256xf32> to vector<16xf32>
    %35 = vector.shape_cast %34 : vector<16xf32> to vector<16x1xf32>
    %36 = arith.addf %30, %35 : vector<16x1xf32>
    %c0_20 = arith.constant 0 : index
    %c0_21 = arith.constant 0 : index
    %37 = vector.load %arg8[%c0_20, %c0_21] : memref<16x1xf32, #tpu.memory_space<vmem>>, vector<16x1xf32>
    tpu.vector_store %arg8[%c0_20, %c0_21], %36 {strides = array<i32>} : memref<16x1xf32, #tpu.memory_space<vmem>>, vector<16x1xf32>,
    %c0_22 = arith.constant 0 : index
    %c0_23 = arith.constant 0 : index
    %38 = vector.load %arg7[%c0_22, %c0_23] : memref<16x1xf32, #tpu.memory_space<vmem>>, vector<16x1xf32>
    tpu.vector_store %arg7[%c0_22, %c0_23], %26 {strides = array<i32>} : memref<16x1xf32, #tpu.memory_space<vmem>>, vector<16x1xf32>,
    %c3_i32 = arith.constant 3 : i32
    %39 = arith.cmpi eq, %arg1, %c3_i32 : i32
    %40 = arith.extui %39 : i1 to i32
    %c0_i32_24 = arith.constant 0 : i32
    %41 = arith.cmpi ne, %40, %c0_i32_24 : i32
    scf.if %41 {
      %c0_25 = arith.constant 0 : index
      %c0_26 = arith.constant 0 : index
      %42 = vector.load %arg7[%c0_25, %c0_26] : memref<16x1xf32, #tpu.memory_space<vmem>>, vector<16x1xf32>
      %c0_27 = arith.constant 0 : index
      %c0_28 = arith.constant 0 : index
      %43 = vector.load %arg8[%c0_27, %c0_28] : memref<16x1xf32, #tpu.memory_space<vmem>>, vector<16x1xf32>
      %44 = math.log %43 : vector<16x1xf32>
      %45 = arith.addf %42, %44 : vector<16x1xf32>
      %c0_29 = arith.constant 0 : index
      %c0_30 = arith.constant 0 : index
      %46 = vector.load %arg9[%c0_29, %c0_30] : memref<16x1xf32, #tpu.memory_space<vmem>>, vector<16x1xf32>
      %47 = arith.subf %45, %46 : vector<16x1xf32>
      %c0_31 = arith.constant 0 : index
      %c0_32 = arith.constant 0 : index
      %48 = vector.load %arg6[%c0_31, %c0_32] : memref<16x1xf32, #tpu.memory_space<vmem>>, vector<16x1xf32>
      tpu.vector_store %arg6[%c0_31, %c0_32], %47 {strides = array<i32>} : memref<16x1xf32, #tpu.memory_space<vmem>>, vector<16x1xf32>,
    } else {
    }
    return
  }
  func.func @transform_0(%arg0: i32, %arg1: i32) -> (i32, i32) {
    %c0_i32 = arith.constant 0 : i32
    %c0_i32_0 = arith.constant 0 : i32
    return %arg0, %c0_i32 : i32, i32
  }
  func.func @transform_1(%arg0: i32, %arg1: i32) -> (i32, i32) {
    %c0_i32 = arith.constant 0 : i32
    %c0_i32_0 = arith.constant 0 : i32
    return %c0_i32, %arg1 : i32, i32
  }
  func.func @transform_2(%arg0: i32, %arg1: i32) -> (i32, i32) {
    %c0_i32 = arith.constant 0 : i32
    %c0_i32_0 = arith.constant 0 : i32
    return %c0_i32, %arg1 : i32, i32
  }
  func.func @transform_3(%arg0: i32, %arg1: i32) -> (i32, i32) {
    %c0_i32 = arith.constant 0 : i32
    %c0_i32_0 = arith.constant 0 : i32
    return %arg0, %c0_i32 : i32, i32
  }
  func.func @transform_4(%arg0: i32, %arg1: i32) -> (i32, i32) {
    %c0_i32 = arith.constant 0 : i32
    %c0_i32_0 = arith.constant 0 : i32
    return %arg0, %c0_i32 : i32, i32
  }
}

</mosaic_0001>

<llo_original>
// kernel: tpu_custom_call.1
$region0: #{tpu_custom_call.1}
  #allocation0 [shape = 'u32[]', space=smem, size = 0x4, offset = 0x4, fixed_abs, tag = 'smem constant byte address 0x4 - core index']
  #allocation1 [shape = 'u32[144,128]{1,0:T(1,128)}', space=vmem, size = 0x12000, scoped, tag = 'internal scratch']
  #allocation2 [shape = 'f32[16,1]{1,0:T(8,128)}', space=vmem, size = 0x2000, scoped, tag = 'scratch operand']
  #allocation3 [shape = 'f32[16,1]{1,0:T(8,128)}', space=vmem, size = 0x2000, scoped, tag = 'scratch operand']
  #allocation4 [shape = 'f32[16,1]{1,0:T(8,128)}', space=vmem, size = 0x2000, scoped, tag = 'scratch operand']
  %s0 = inlined_call_operand.vmem [shape: bf16[16,64], index: 0, kind: input, shape index: {}]
  %s1 = inlined_call_operand.hbm [shape: bf16[64,1024], index: 1, kind: input, shape index: {}]
  %s2 = inlined_call_operand.vmem [shape: f32[1,1024], index: 2, kind: input, shape index: {}]
  %s3 = inlined_call_operand.vmem [shape: s32[16,1], index: 3, kind: input, shape index: {}]
  %s4 = inlined_call_operand.vmem [shape: f32[16,1], index: 4, kind: output, shape index: {}]
  %s5 = sld [smem:[#allocation0]]
  $region61: #{tpu_custom_call.1} parent=0
    _
  %s7 = ssub.s32 1, %s5
  %s8 = scalar_select 0, %s7, %s5
  $region1: #{tpu_custom_call.1} parent=0
    #allocation5 [shape = 'u8[65536]{0}', space=vmem, size = 0x10000, scoped, tag = 'input window, operand 1']
    #allocation6 [shape = 's32[2]{0}', space=sflag, size = 0x8, scoped, tag = 'scoped memory for tpu_custom_call.1']
    %9 = vsyncpa [#allocation6], 0
    %s10 = scalar_lea.sflag [#allocation6], 1
    %11 = vsyncpa %s10, 0
    loop: start=0, step=1, limit=6
    $region2: #{tpu_custom_call.1} parent=1 // loop_pre_header
      _
    $region3: #{tpu_custom_call.1} parent=1 // loop_header
      %s13 = sphi 0, %s17
      %p14 = scmp.ge.s32.totalorder %s13, 6
      %s20 = sphi 0, %s32
      %s21 = sphi 0, %s28
      %s22 = sphi 0, %s20
      %s23 = sphi 0, %s21
      %s24 = sphi 0, %s22
      %s25 = sphi 0, %s23
      %s35 = sphi 0, %s37
      %s38 = sphi 0, %s35
      %s39 = sphi 0, %s38
      %s55 = sphi 0, %s39
      %s61 = sphi 0, %s63
      %s64 = sphi 0, %s61
      %s65 = sphi 0, %s64
      %s81 = sphi 0, %s65
      %s87 = sphi 0, %s89
      %s90 = sphi 0, %s87
      %s91 = sphi 0, %s90
      %s107 = sphi 0, %s91
      %s113 = sphi 0, %s115
      %s116 = sphi 0, %s113
      %s117 = sphi 0, %s116
      %s133 = sphi 0, %s117
      %s139 = sphi 0, %s141
      %s142 = sphi 0, %s139
      %s143 = sphi 0, %s142
      %s159 = sphi 0, %s143
    $region4: #{tpu_custom_call.1} parent=1 // loop_header_branch
      %16 = sbr.rel (%p14) target = $region8
    $region5: #{tpu_custom_call.1} parent=1 // loop_body
      %s18 = ssub.s32 %s13, 1
      %s19 = ssub.s32 %s13, 2
      %s26 = sadd.s32 1, %s21
      %p27 = scmp.ge.s32.totalorder %s26, 4
      %s28 = scalar_select %p27, 0, %s26
      %s29 = sadd.s32 1, %s20
      %s30 = scalar_select %p27, %s29, %s20
      %p31 = scmp.ge.s32.totalorder %s30, 1
      %s32 = scalar_select %p31, 0, %s30
      %s33 = ssub.s32 %s20, %s32
      %p34 = scmp.eq.s32.totalorder %s33, 0
      %s36 = sadd.s32 %s35, 1
      %s37 = scalar_select %p34, %s35, %s36
      %p40 = pneg %p34
      %p41 = scmp.eq.s32.totalorder %s13, 3
      %p42 = por %p40, %p41
      %p43 = scmp.ne.s32.totalorder %s35, %s38
      %p44 = scmp.eq.s32.totalorder %s13, 0
      %p45 = por %p43, %p44
      %p46 = scmp.ne.s32.totalorder %s35, %s38
      %p47 = scmp.eq.s32.totalorder %s18, 3
      %p48 = por %p46, %p47
      %p49 = scmp.ne.s32.totalorder %s38, %s39
      %p50 = scmp.eq.s32.totalorder %s18, 0
      %p51 = por %p49, %p50
      %p52 = scmp.ne.s32.totalorder %s38, %s39
      %p53 = scmp.eq.s32.totalorder %s19, 3
      %p54 = por %p52, %p53
      %p56 = scmp.ne.s32.totalorder %s39, %s55
      %p57 = scmp.eq.s32.totalorder %s19, 0
      %p58 = por %p56, %p57
      %s59 = ssub.s32 %s21, %s28
      %p60 = scmp.eq.s32.totalorder %s59, 0
      %s62 = sadd.s32 %s61, 1
      %s63 = scalar_select %p60, %s61, %s62
      %p66 = pneg %p60
      %p67 = scmp.eq.s32.totalorder %s13, 3
      %p68 = por %p66, %p67
      %p69 = scmp.ne.s32.totalorder %s61, %s64
      %p70 = scmp.eq.s32.totalorder %s13, 0
      %p71 = por %p69, %p70
      %p72 = scmp.ne.s32.totalorder %s61, %s64
      %p73 = scmp.eq.s32.totalorder %s18, 3
      %p74 = por %p72, %p73
      %p75 = scmp.ne.s32.totalorder %s64, %s65
      %p76 = scmp.eq.s32.totalorder %s18, 0
      %p77 = por %p75, %p76
      %p78 = scmp.ne.s32.totalorder %s64, %s65
      %p79 = scmp.eq.s32.totalorder %s19, 3
      %p80 = por %p78, %p79
      %p82 = scmp.ne.s32.totalorder %s65, %s81
      %p83 = scmp.eq.s32.totalorder %s19, 0
      %p84 = por %p82, %p83
      %s85 = ssub.s32 %s21, %s28
      %p86 = scmp.eq.s32.totalorder %s85, 0
      %s88 = sadd.s32 %s87, 1
      %s89 = scalar_select %p86, %s87, %s88
      %p92 = pneg %p86
      %p93 = scmp.eq.s32.totalorder %s13, 3
      %p94 = por %p92, %p93
      %p95 = scmp.ne.s32.totalorder %s87, %s90
      %p96 = scmp.eq.s32.totalorder %s13, 0
      %p97 = por %p95, %p96
      %p98 = scmp.ne.s32.totalorder %s87, %s90
      %p99 = scmp.eq.s32.totalorder %s18, 3
      %p100 = por %p98, %p99
      %p101 = scmp.ne.s32.totalorder %s90, %s91
      %p102 = scmp.eq.s32.totalorder %s18, 0
      %p103 = por %p101, %p102
      %p104 = scmp.ne.s32.totalorder %s90, %s91
      %p105 = scmp.eq.s32.totalorder %s19, 3
      %p106 = por %p104, %p105
      %p108 = scmp.ne.s32.totalorder %s91, %s107
      %p109 = scmp.eq.s32.totalorder %s19, 0
      %p110 = por %p108, %p109
      %s111 = ssub.s32 %s20, %s32
      %p112 = scmp.eq.s32.totalorder %s111, 0
      %s114 = sadd.s32 %s113, 1
      %s115 = scalar_select %p112, %s113, %s114
      %p118 = pneg %p112
      %p119 = scmp.eq.s32.totalorder %s13, 3
      %p120 = por %p118, %p119
      %p121 = scmp.ne.s32.totalorder %s113, %s116
      %p122 = scmp.eq.s32.totalorder %s13, 0
      %p123 = por %p121, %p122
      %p124 = scmp.ne.s32.totalorder %s113, %s116
      %p125 = scmp.eq.s32.totalorder %s18, 3
      %p126 = por %p124, %p125
      %p127 = scmp.ne.s32.totalorder %s116, %s117
      %p128 = scmp.eq.s32.totalorder %s18, 0
      %p129 = por %p127, %p128
      %p130 = scmp.ne.s32.totalorder %s116, %s117
      %p131 = scmp.eq.s32.totalorder %s19, 3
      %p132 = por %p130, %p131
      %p134 = scmp.ne.s32.totalorder %s117, %s133
      %p135 = scmp.eq.s32.totalorder %s19, 0
      %p136 = por %p134, %p135
      %s137 = ssub.s32 %s20, %s32
      %p138 = scmp.eq.s32.totalorder %s137, 0
      %s140 = sadd.s32 %s139, 1
      %s141 = scalar_select %p138, %s139, %s140
      %p144 = pneg %p138
      %p145 = scmp.eq.s32.totalorder %s13, 3
      %p146 = por %p144, %p145
      %p147 = scmp.ne.s32.totalorder %s139, %s142
      %p148 = scmp.eq.s32.totalorder %s13, 0
      %p149 = por %p147, %p148
      %p150 = scmp.ne.s32.totalorder %s139, %s142
      %p151 = scmp.eq.s32.totalorder %s18, 3
      %p152 = por %p150, %p151
      %p153 = scmp.ne.s32.totalorder %s142, %s143
      %p154 = scmp.eq.s32.totalorder %s18, 0
      %p155 = por %p153, %p154
      %p156 = scmp.ne.s32.totalorder %s142, %s143
      %p157 = scmp.eq.s32.totalorder %s19, 3
      %p158 = por %p156, %p157
      %p160 = scmp.ne.s32.totalorder %s143, %s159
      %p161 = scmp.eq.s32.totalorder %s19, 0
      %p162 = por %p160, %p161
      %p163 = scmp.le.s32.totalorder 1, %s13
      %p164 = scmp.lt.s32.totalorder %s13, 5
      %p165 = pnand %p163, %p164
      %p166 = pneg %p165
      // Predicated region
      $region9: #{tpu_custom_call.1} parent=5 // pred_check
        _
      $region10: #{tpu_custom_call.1} parent=5 // pred_check_branch
        %168 = sbr.rel (%p165) target = $region12
      $region11: #{tpu_custom_call.1} parent=5 // pred_region
        %s169 = ssub.s32 %s13, 1
        // Predicated region
        $region13: #{tpu_custom_call.1} parent=11 // pred_check
          %p170 = pneg %p51
        $region14: #{tpu_custom_call.1} parent=11 // pred_check_branch
          %172 = sbr.rel (%p170) target = $region16
        $region15: #{tpu_custom_call.1} parent=11 // pred_region
          %s173 = smul.u32 2, %s22
          %p174 = scmp.lt.s32.totalorder %s173, 1
          %s175 = scalar_select %p174, %s173, 1
          %s176 = smul.addr %s175, 4
          %s177 = scalar_lea.vmem %s0, %s176
          %s178 = smul.u32 2, %s22
        $region16: #{tpu_custom_call.1} parent=11 // pred_fallthru
          _
        // Predicated region
        $region17: #{tpu_custom_call.1} parent=11 // pred_check
          %p179 = pneg %p129
        $region18: #{tpu_custom_call.1} parent=11 // pred_check_branch
          %181 = sbr.rel (%p179) target = $region20
        $region19: #{tpu_custom_call.1} parent=11 // pred_region
          %s182 = smul.u32 2, %s22
          %p183 = scmp.lt.s32.totalorder %s182, 1
          %s184 = scalar_select %p183, %s182, 1
          %s185 = smul.addr %s184, 8
          %s186 = scalar_lea.vmem %s3, %s185
          %s187 = smul.u32 2, %s22
        $region20: #{tpu_custom_call.1} parent=11 // pred_fallthru
          _
      $region12: #{tpu_custom_call.1} parent=5 // pred_fallthru
        _
      %p188 = scmp.lt.s32.totalorder %s13, 4
      // Predicated region
      $region21: #{tpu_custom_call.1} parent=5 // pred_check
        %p189 = pneg %p188
      $region22: #{tpu_custom_call.1} parent=5 // pred_check_branch
        %191 = sbr.rel (%p189) target = $region24
      $region23: #{tpu_custom_call.1} parent=5 // pred_region
        // Predicated region
        $region25: #{tpu_custom_call.1} parent=23 // pred_check
          %p192 = pneg %p71
        $region26: #{tpu_custom_call.1} parent=23 // pred_check_branch
          %194 = sbr.rel (%p192) target = $region28
        $region27: #{tpu_custom_call.1} parent=23 // pred_region
          %s195 = sand.u32 %s61, 1
          %s196 = scalar_lea.sflag [#allocation6], %s195
          %s197 = sand.u32 %s61, 1
          %s198 = smul.addr %s197, 64
          %s199 = scalar_lea.vmem [#allocation5], %s198
          %s200 = smul.u32 2, %s21
          %s202 = ssub.s32 1024, 1024
          %203 = vsyncadd %s196, %s202
          %s204 = smul.addr %s200, 64
          %s205 = scalar_lea.hbm %s1, %s204
          %s206 = sshll.u32 %s199, 4
          %s207 = int_to_ptr.vmem [resolvable:$true] %s206
          %212 = dma.hbm_to_vmem [thread:$0]  %s205, 1024, %s207, %s196, 512, 128, 8
        $region28: #{tpu_custom_call.1} parent=23 // pred_fallthru
          _
        // Predicated region
        $region29: #{tpu_custom_call.1} parent=23 // pred_check
          %p213 = pneg %p97
        $region30: #{tpu_custom_call.1} parent=23 // pred_check_branch
          %215 = sbr.rel (%p213) target = $region32
        $region31: #{tpu_custom_call.1} parent=23 // pred_region
          %s216 = smul.u32 2, %s21
          %p217 = scmp.lt.s32.totalorder %s216, 7
          %s218 = scalar_select %p217, %s216, 7
          %s219 = scalar_lea.vmem %s2, %s218
          %s220 = smul.u32 2, %s21
        $region32: #{tpu_custom_call.1} parent=23 // pred_fallthru
          _
      $region24: #{tpu_custom_call.1} parent=5 // pred_fallthru
        _
      %p221 = scmp.le.s32.totalorder 1, %s13
      %p222 = scmp.lt.s32.totalorder %s13, 5
      %p223 = pnand %p221, %p222
      %p224 = pneg %p223
      // Predicated region
      $region33: #{tpu_custom_call.1} parent=5 // pred_check
        _
      $region34: #{tpu_custom_call.1} parent=5 // pred_check_branch
        %226 = sbr.rel (%p223) target = $region36
      $region35: #{tpu_custom_call.1} parent=5 // pred_region
        %s227 = ssub.s32 %s13, 1
        %s228 = sand.u32 %s64, 1
        %s229 = scalar_lea.sflag [#allocation6], %s228
        %s230 = sand.u32 %s64, 1
        %s231 = smul.addr %s230, 64
        %s232 = scalar_lea.vmem [#allocation5], %s231
        // Predicated region
        $region37: #{tpu_custom_call.1} parent=35 // pred_check
          %p233 = pneg %p77
        $region38: #{tpu_custom_call.1} parent=35 // pred_check_branch
          %235 = sbr.rel (%p233) target = $region40
        $region39: #{tpu_custom_call.1} parent=35 // pred_region
          %236 = dma.done %s229, 1024
        $region40: #{tpu_custom_call.1} parent=35 // pred_fallthru
          _
        %s237 = smul.u32 2, %s22
        %p238 = scmp.lt.s32.totalorder %s237, 1
        %s239 = scalar_select %p238, %s237, 1
        %s240 = smul.addr %s239, 4
        %s241 = scalar_lea.vmem %s0, %s240
        %p242 = pneg %p51
        %p243 = pneg %p48
        %s244 = sand.u32 %s64, 1
        %s245 = scalar_lea.sflag [#allocation6], %s244
        %s246 = sand.u32 %s64, 1
        %s247 = smul.addr %s246, 64
        %s248 = scalar_lea.vmem [#allocation5], %s247
        %p249 = pneg %p77
        %p250 = pneg %p74
        %s251 = smul.u32 2, %s23
        %p252 = scmp.lt.s32.totalorder %s251, 7
        %s253 = scalar_select %p252, %s251, 7
        %s254 = scalar_lea.vmem %s2, %s253
        %p255 = pneg %p103
        %p256 = pneg %p100
        %s257 = smul.u32 2, %s22
        %p258 = scmp.lt.s32.totalorder %s257, 1
        %s259 = scalar_select %p258, %s257, 1
        %s260 = smul.addr %s259, 8
        %s261 = scalar_lea.vmem %s3, %s260
        %p262 = pneg %p129
        %p263 = pneg %p126
        %p264 = pneg %p155
        %p265 = pneg %p152
        %s266 = smul.u32 2, %s22
        %p267 = scmp.lt.s32.totalorder %s266, 1
        %s268 = scalar_select %p267, %s266, 1
        %s269 = smul.addr %s268, 8
        %s270 = scalar_lea.vmem %s4, %s269
        %s271 = smul.u32 2, %s22
        %p272 = scmp.lt.s32.totalorder %s271, 1
        %s273 = scalar_select %p272, %s271, 1
        %s274 = smul.addr %s273, 4
        %s275 = scalar_lea.vmem %s0, %s274
        %s276 = smul.u32 2, %s22
        %s277 = smul.u32 2, %s23
        %s278 = smul.u32 2, %s23
        %p279 = scmp.lt.s32.totalorder %s278, 7
        %s280 = scalar_select %p279, %s278, 7
        %s281 = scalar_lea.vmem %s2, %s280
        %s282 = smul.u32 2, %s23
        %s283 = smul.u32 2, %s22
        %p284 = scmp.lt.s32.totalorder %s283, 1
        %s285 = scalar_select %p284, %s283, 1
        %s286 = smul.addr %s285, 8
        %s287 = scalar_lea.vmem %s3, %s286
        %s288 = smul.u32 2, %s22
        %s289 = smul.u32 2, %s22
        %p290 = scmp.lt.s32.totalorder %s289, 1
        %s291 = scalar_select %p290, %s289, 1
        %s292 = smul.addr %s291, 8
        %s293 = scalar_lea.vmem %s4, %s292
        %s294 = smul.u32 2, %s22
        %p296 = scmp.eq.s32.totalorder %s23, 0
        // Predicated region
        $region41: #{tpu_custom_call.1} parent=35 // pred_check
          %p297 = pneg %p296
        $region42: #{tpu_custom_call.1} parent=35 // pred_check_branch
          %299 = sbr.rel (%p297) target = $region44
        $region43: #{tpu_custom_call.1} parent=35 // pred_region
          %vm300 = vcmask 7168
          %301 = vst.msk [vmem:[#allocation2] sm:$0xff] %vm300, -inf
          %302 = vst.msk [vmem:[#allocation2 + $0x8] sm:$0xff] %vm300, -inf
          %303 = vst.msk [vmem:[#allocation3] sm:$0xff] %vm300, 0.0
          %304 = vst.msk [vmem:[#allocation3 + $0x8] sm:$0xff] %vm300, 0.0
          %305 = vst.msk [vmem:[#allocation4] sm:$0xff] %vm300, 0.0
          %306 = vst.msk [vmem:[#allocation4 + $0x8] sm:$0xff] %vm300, 0.0
        $region44: #{tpu_custom_call.1} parent=35 // pred_fallthru
          _
        %v307 = vld [vmem:[%s275] sm:$0xf]
        %v308 = vld [vmem:[%s275 + $0x4] sm:$0xf]
        %v309 = vld [vmem:[%s232] sm:$0xff]
        %v310 = vld [vmem:[%s232 + $0x8] sm:$0xff]
        %v311 = vld [vmem:[%s232 + $0x10] sm:$0xff]
        %v312 = vld [vmem:[%s232 + $0x18] sm:$0xff]
        %v313 = vld [vmem:[%s232 + $0x20] sm:$0xff]
        %v314 = vld [vmem:[%s232 + $0x28] sm:$0xff]
        %v315 = vld [vmem:[%s232 + $0x30] sm:$0xff]
        %v316 = vld [vmem:[%s232 + $0x38] sm:$0xff]
        %v317 = vld [vmem:[%s281] sm:$0x3]
        %v319 = vlaneseq
        %v320 = vshrl.u32 %v319, 7
        %v321 = vsub.s32 0, %v320
        %v322 = vrot.slane %v317, %v321
        %v323 = vlaneseq
        %v324 = vshrl.u32 %v323, 7
        %v325 = vsub.s32 1, %v324
        %v326 = vrot.slane %v317, %v325
        %v331 = vunpack.c.l.b16 %v307
        %v332 = vunpack.c.l.b16 %v308
        %v333 = vpack.c.b16 %v332, %v331
        %v342 = vunpack.c.l.b16 %v309
        %v343 = vunpack.c.h.b16 %v309
        %v344 = vunpack.c.l.b16 %v310
        %v345 = vunpack.c.h.b16 %v310
        %v346 = vunpack.c.l.b16 %v311
        %v347 = vunpack.c.h.b16 %v311
        %v348 = vunpack.c.l.b16 %v312
        %v349 = vunpack.c.h.b16 %v312
        %v350 = vunpack.c.l.b16 %v313
        %v351 = vunpack.c.h.b16 %v313
        %v352 = vunpack.c.l.b16 %v314
        %v353 = vunpack.c.h.b16 %v314
        %v354 = vunpack.c.l.b16 %v315
        %v355 = vunpack.c.h.b16 %v315
        %v356 = vunpack.c.l.b16 %v316
        %v357 = vunpack.c.h.b16 %v316
        %v358 = vpack.c.b16 %v344, %v342
        %v359 = vpack.c.b16 %v345, %v343
        %v360 = vpack.c.b16 %v348, %v346
        %v361 = vpack.c.b16 %v349, %v347
        %v362 = vpack.c.b16 %v352, %v350
        %v363 = vpack.c.b16 %v353, %v351
        %v364 = vpack.c.b16 %v356, %v354
        %v365 = vpack.c.b16 %v357, %v355
        %vm374 = vcmask 523264
        %v376 = vsel %vm374, %v333, 0
        %378 = vmatprep.subr.bf16.mxu0 0
        %379 = vmatpush1.bf16.msra.mxu0 0
        %380 = vmatprep.subr.bf16.mxu0 0
        %381 = vmatpush1.bf16.msra.mxu0 0
        %382 = vmatprep.subr.bf16.mxu0 0
        %383 = vmatpush1.bf16.msra.mxu0 0
        %384 = vmatprep.subr.bf16.mxu0 0
        %385 = vmatpush1.bf16.msra.mxu0 0
        %386 = vmatprep.subr.bf16.mxu0 %v365
        %387 = vmatpush1.bf16.msra.mxu0 %v364
        %388 = vmatprep.subr.bf16.mxu0 %v363
        %389 = vmatpush1.bf16.msra.mxu0 %v362
        %390 = vmatprep.subr.bf16.mxu0 %v361
        %391 = vmatpush1.bf16.msra.mxu0 %v360
        %392 = vmatprep.subr.bf16.mxu0 %v359
        %393 = vmatpush1.bf16.msra.mxu0 %v358
        %394 = vmatprep.subr.bf16.mxu0 0
        %395 = vmatpush2.bf16.msra.mxu0 0
        %396 = vmatprep.subr.bf16.mxu0 0
        %397 = vmatpush2.bf16.msra.mxu0 0
        %398 = vmatprep.subr.bf16.mxu0 0
        %399 = vmatpush2.bf16.msra.mxu0 0
        %400 = vmatprep.subr.bf16.mxu0 0
        %401 = vmatpush2.bf16.msra.mxu0 0
        %402 = vmatprep.subr.bf16.mxu0 0
        %403 = vmatpush2.bf16.msra.mxu0 0
        %404 = vmatprep.subr.bf16.mxu0 0
        %405 = vmatpush2.bf16.msra.mxu0 0
        %406 = vmatprep.subr.bf16.mxu0 0
        %407 = vmatpush2.bf16.msra.mxu0 0
        %408 = vmatprep.subr.bf16.mxu0 0
        %409 = vmatpush2.bf16.msra.mxu0 0
        %410 = vmatprep.mubr.bf16.mxu0 0
        %411 = vmatmul.mubr.bf16.gmra.mxu0 %v376
        %v412 = vpop.f32.mrf.mxu0
        %v413 = vadd.f32 %v322, %v412
        %v414 = vpop.f32.mrf.mxu0
        %v415 = vadd.f32 %v326, %v414
        %v416 = vpop.f32.mrf.mxu0
        %v417 = vadd.f32 %v322, %v416
        %v418 = vpop.f32.mrf.mxu0
        %v419 = vadd.f32 %v326, %v418
        %420 = vdwg.mxu0
        %s421 = smul.u32 %s23, 256
        %v422 = vlaneseq
        %v423 = vand.u32 %v422, 127
        %v424 = vadd.s32 %v423, 128
        %v425 = vstv %s421
        %v426 = vadd.s32 %v425, %v423
        %v427 = vadd.s32 %v425, %v424
        %v428 = vld [vmem:[%s287] sm:$0xff]
        %v429 = vld [vmem:[%s287 + $0x8] sm:$0xff]
        %430 = vset.pattern.permute.xlu0 0
        %431 = vperm.xlu0 %430, %v428
        %v432 = vpop.permute.xlu0 %431
        %433 = vset.pattern.permute.xlu0 0
        %434 = vperm.xlu0 %433, %v429
        %v435 = vpop.permute.xlu0 %434
        %vm436 = vcmp.eq.s32.totalorder %v426, %v432
        %vm437 = vcmp.eq.s32.totalorder %v427, %v432
        %vm438 = vcmp.eq.s32.totalorder %v426, %v435
        %vm439 = vcmp.eq.s32.totalorder %v427, %v435
        %v440 = vld [vmem:[#allocation4] sm:$0xff]
        %v441 = vld [vmem:[#allocation4 + $0x8] sm:$0xff]
        %v442 = vsel %vm436, %v413, 0.0
        %v443 = vsel %vm437, %v415, 0.0
        %v444 = vsel %vm438, %v417, 0.0
        %v445 = vsel %vm439, %v419, 0.0
        %v446 = vadd.f32 %v442, %v443
        %447 = vadd.xlane.f32.xlu0 %v446
        %v448 = vpop.xlane.xlu0 %447
        %v449 = vadd.f32 %v444, %v445
        %450 = vadd.xlane.f32.xlu0 %v449
        %v451 = vpop.xlane.xlu0 %450
        %v452 = vadd.f32 %v440, %v448
        %v453 = vadd.f32 %v441, %v451
        %vm454 = vcmask 7168
        %455 = vst.msk [vmem:[#allocation4] sm:$0xff] %vm454, %v452
        %456 = vst.msk [vmem:[#allocation4 + $0x8] sm:$0xff] %vm454, %v453
        %v457 = vld [vmem:[#allocation2] sm:$0xff]
        %v458 = vld [vmem:[#allocation2 + $0x8] sm:$0xff]
        %v459 = vmax.f32 %v413, %v415
        %460 = vmax.xlane.f32.xlu0 %v459
        %v461 = vpop.xlane.xlu0 %460
        %v462 = vmax.f32 %v417, %v419
        %463 = vmax.xlane.f32.xlu0 %v462
        %v464 = vpop.xlane.xlu0 %463
        %v465 = vmax.f32 %v457, %v461
        %v466 = vmax.f32 %v458, %v464
        %v467 = vld [vmem:[#allocation3] sm:$0xff]
        %v468 = vld [vmem:[#allocation3 + $0x8] sm:$0xff]
        %v469 = vsub.f32 %v457, %v465
        %v470 = vsub.f32 %v458, %v466
        %v471 = vmul.f32 %v469, 1.442695
        %v472 = vpow.pop %v471
        %v473 = vmul.f32 %v470, 1.442695
        %v474 = vpow.pop %v473
        %v475 = vmul.f32 %v467, %v472
        %v476 = vmul.f32 %v468, %v474
        %478 = vset.pattern.permute.xlu0 0
        %479 = vperm.xlu0 %478, %v465
        %v480 = vpop.permute.xlu0 %479
        %483 = vset.pattern.permute.xlu0 0
        %484 = vperm.xlu0 %483, %v466
        %v485 = vpop.permute.xlu0 %484
        %v487 = vsub.f32 %v413, %v480
        %v488 = vsub.f32 %v415, %v480
        %v489 = vsub.f32 %v417, %v485
        %v490 = vsub.f32 %v419, %v485
        %v491 = vmul.f32 %v487, 1.442695
        %v492 = vpow.pop %v491
        %v493 = vmul.f32 %v488, 1.442695
        %v494 = vpow.pop %v493
        %v495 = vmul.f32 %v489, 1.442695
        %v496 = vpow.pop %v495
        %v497 = vmul.f32 %v490, 1.442695
        %v498 = vpow.pop %v497
        %v499 = vadd.f32 %v492, %v494
        %500 = vadd.xlane.f32.xlu0 %v499
        %v501 = vpop.xlane.xlu0 %500
        %v502 = vadd.f32 %v496, %v498
        %503 = vadd.xlane.f32.xlu0 %v502
        %v504 = vpop.xlane.xlu0 %503
        %v505 = vadd.f32 %v475, %v501
        %v506 = vadd.f32 %v476, %v504
        %507 = vst.msk [vmem:[#allocation3] sm:$0xff] %vm454, %v505
        %508 = vst.msk [vmem:[#allocation3 + $0x8] sm:$0xff] %vm454, %v506
        %509 = vst.msk [vmem:[#allocation2] sm:$0xff] %vm454, %v465
        %510 = vst.msk [vmem:[#allocation2 + $0x8] sm:$0xff] %vm454, %v466
        %p511 = scmp.eq.s32.totalorder %s23, 3
        // Predicated region
        $region45: #{tpu_custom_call.1} parent=35 // pred_check
          %p512 = pneg %p511
        $region46: #{tpu_custom_call.1} parent=35 // pred_check_branch
          %514 = sbr.rel (%p512) target = $region48
        $region47: #{tpu_custom_call.1} parent=35 // pred_region
          %v515 = vld [vmem:[#allocation2] sm:$0xff]
          %v516 = vld [vmem:[#allocation2 + $0x8] sm:$0xff]
          %v517 = vld [vmem:[#allocation3] sm:$0xff]
          %v518 = vld [vmem:[#allocation3 + $0x8] sm:$0xff]
          %v519 = vlog2.pop %v517
          %v520 = vmul.f32 %v519, 0.6931472
          %v521 = vlog2.pop %v518
          %v522 = vmul.f32 %v521, 0.6931472
          %v523 = vadd.f32 %v515, %v520
          %v524 = vadd.f32 %v516, %v522
          %v525 = vld [vmem:[#allocation4] sm:$0xff]
          %v526 = vld [vmem:[#allocation4 + $0x8] sm:$0xff]
          %v527 = vsub.f32 %v523, %v525
          %v528 = vsub.f32 %v524, %v526
          %529 = vst.msk [vmem:[%s293] sm:$0xff] %vm454, %v527
          %530 = vst.msk [vmem:[%s293 + $0x8] sm:$0xff] %vm454, %v528
        $region48: #{tpu_custom_call.1} parent=35 // pred_fallthru
          _
        %s531 = smul.u32 2, %s22
        %p532 = scmp.lt.s32.totalorder %s531, 1
        %s533 = scalar_select %p532, %s531, 1
        %s534 = smul.addr %s533, 8
        %s535 = scalar_lea.vmem %s4, %s534
        // Predicated region
        $region49: #{tpu_custom_call.1} parent=35 // pred_check
          %p536 = pneg %p152
        $region50: #{tpu_custom_call.1} parent=35 // pred_check_branch
          %538 = sbr.rel (%p536) target = $region52
        $region51: #{tpu_custom_call.1} parent=35 // pred_region
          %s539 = smul.u32 2, %s22
        $region52: #{tpu_custom_call.1} parent=35 // pred_fallthru
          _
        // Predicated region
        $region53: #{tpu_custom_call.1} parent=35 // pred_check
          %p540 = pneg %p152
        $region54: #{tpu_custom_call.1} parent=35 // pred_check_branch
          %542 = sbr.rel (%p540) target = $region56
        $region55: #{tpu_custom_call.1} parent=35 // pred_region
          %s543 = smul.u32 2, %s22
          %p544 = scmp.lt.s32.totalorder %s543, 1
          %s545 = scalar_select %p544, %s543, 1
          %s546 = smul.addr %s545, 8
          %s547 = scalar_lea.vmem %s4, %s546
        $region56: #{tpu_custom_call.1} parent=35 // pred_fallthru
          _
      $region36: #{tpu_custom_call.1} parent=5 // pred_fallthru
        _
      %p548 = scmp.le.s32.totalorder 2, %s13
      // Predicated region
      $region57: #{tpu_custom_call.1} parent=5 // pred_check
        %p549 = pneg %p548
      $region58: #{tpu_custom_call.1} parent=5 // pred_check_branch
        %551 = sbr.rel (%p549) target = $region60
      $region59: #{tpu_custom_call.1} parent=5 // pred_region
        %s552 = ssub.s32 %s13, 2
      $region60: #{tpu_custom_call.1} parent=5 // pred_fallthru
        _
    $region6: #{tpu_custom_call.1} parent=1 // loop_footer
      %s17 = sadd.s32 1, %s13
    $region7: #{tpu_custom_call.1} parent=1 // loop_footer_branch
      %12 = sbr.rel target = $region3
    $region8: #{tpu_custom_call.1} parent=1 // loop_exit
      _
    %553 = vsyncpa [#allocation6], 1
    %s554 = scalar_lea.sflag [#allocation6], 1
    %555 = vsyncpa %s554, 1

</llo_original>
